<compile_context>
chip_gen: v6e
topology: v6e:2x2x1
jax: 0.10.0
libtpu: 0.0.40
codegen_flags: <defaults>
</compile_context>

<pallas_src>
import math

import jax
import jax.numpy as jnp
from jax.experimental import pallas as pl
from jax.experimental.pallas import tpu as pltpu

KH, KW = 3, 3
_LANE = 128


def _conv_kernel(w_ref, b_ref, x_ref, o_ref):
    # w_ref: (KH, KW) f32 in SMEM, b_ref: (1,) f32 in SMEM
    # x_ref: (H, W, TN) f32 in VMEM   -- batch chunk on the lane axis
    # o_ref: (H_out, W_out, TN) f32 in VMEM -- lane-dense output tile
    H_out, W_out, _ = o_ref.shape

    x = x_ref[...]                                        # single full VMEM load
    acc = jnp.full(o_ref.shape, b_ref[0], jnp.float32)    # bias-initialized accumulator
    for kj in range(KW):
        # One sublane (W-axis) shift per kj, reused across the 3 ki taps.
        x_kj = x[:, kj:kj + W_out, :]                     # (H, W_out, TN)
        for ki in range(KH):
            # ki slice is along the leading dim -> just a different vreg row set.
            acc = acc + w_ref[ki, kj] * x_kj[ki:ki + H_out]
    o_ref[...] = acc.astype(o_ref.dtype)


def _choose_batch_tile(N, H, W):
    """Pick lane-axis batch tile TN and padded batch size N_pad."""
    if N <= _LANE:
        # Single small block; block last dim == full array dim, which is allowed.
        return N, N
    per_n_bytes = H * W * 4                # f32 input bytes per batch element
    target = 2 * 1024 * 1024               # ~2 MiB input block per buffer:
    #                                        double-buffered in+out stays well under
    #                                        v5e's 16 MiB / v7x's 32 MiB scoped VMEM.
    tn = (target // per_n_bytes) // _LANE * _LANE
    tn = max(_LANE, min(tn, 2048))
    n_pad = pl.cdiv(N, tn) * tn
    return tn, n_pad


def conv2d_1x1ch_3x3(x_nchw, weight, bias):
    """x_nchw: (N, 1, H, W) f32, weight: (1, 1, 3, 3) f32, bias: (1,) f32.
    Returns (N, 1, H-2, W-2) f32 — identical semantics to
    nn.Conv2d(1, 1, kernel_size=3, padding=0, stride=1)."""
    N, C, H, W = x_nchw.shape
    assert C == 1 and weight.shape == (1, 1, KH, KW) and bias.shape == (1,)
    H_out, W_out = H - KH + 1, W - KW + 1

    TN, N_pad = _choose_batch_tile(N, H, W)
    num_chunks = N_pad // TN

    # Lane-dense layout: batch on the last (lane) axis.  Wrapper-side transpose/pad
    # is layout plumbing; padded batch columns are sliced off after the call.
    x = x_nchw.reshape(N, H, W).astype(jnp.float32).transpose(1, 2, 0)  # (H, W, N)
    if N_pad != N:
        x = jnp.pad(x, ((0, 0), (0, 0), (0, N_pad - N)))
    w = weight.reshape(KH, KW).astype(jnp.float32)
    b = bias.astype(jnp.float32)

    out = pl.pallas_call(
        _conv_kernel,
        out_shape=jax.ShapeDtypeStruct((H_out, W_out, N_pad), jnp.float32),
        grid=(num_chunks,),
        in_specs=[
            pl.BlockSpec(memory_space=pltpu.MemorySpace.SMEM),    # weight (3, 3)
            pl.BlockSpec(memory_space=pltpu.MemorySpace.SMEM),    # bias (1,)
            pl.BlockSpec((H, W, TN), lambda n: (0, 0, n)),        # batch-chunked input
        ],
        out_specs=pl.BlockSpec((H_out, W_out, TN), lambda n: (0, 0, n)),
        compiler_params=pltpu.CompilerParams(
            dimension_semantics=("parallel",),        # shards batch chunks across TCs on v7x
            vmem_limit_bytes=32 * 1024 * 1024,        # explicit, safe on v5e/v6e/v7x
        ),
    )(w, b, x)

    # (H_out, W_out, N_pad) -> (N, 1, H_out, W_out)
    return out[:, :, :N].transpose(2, 0, 1).reshape(N, 1, H_out, W_out)


if __name__ == "__main__":
    key = jax.random.PRNGKey(0)
    k_x, k_w, k_b = jax.random.split(key, 3)

    # Deterministic synthetic parameters (shapes from MyModule.__init__):
    # Conv2d(1, 1, kernel_size=(3, 3)) -> weight (1, 1, 3, 3), bias (1,)
    fan_in = 1 * KH * KW
    bound = 1.0 / math.sqrt(fan_in)
    weight = jax.random.uniform(k_w, (1, 1, KH, KW), jnp.float32, -bound, bound)
    bias = jax.random.uniform(k_b, (1,), jnp.float32, -bound, bound)

    # Small input consistent with the module: NCHW, single channel.
    x = jax.random.normal(k_x, (2, 1, 16, 16), jnp.float32)

    y = jax.jit(conv2d_1x1ch_3x3)(x, weight, bias)
    jax.block_until_ready(y)

    # Cross-check against a plain-JAX reference (same valid-conv semantics).
    ref = jax.lax.conv_general_dilated(
        x, weight, window_strides=(1, 1), padding="VALID",
        dimension_numbers=("NCHW", "OIHW", "NCHW")) + bias.reshape(1, 1, 1, 1)
    assert y.shape == (2, 1, 14, 14)
    assert jnp.allclose(y, ref, atol=1e-5, rtol=1e-5)

    print("KERNEL_OK")
</pallas_src>

<mosaic_0001>
module attributes {stable_mosaic.version = 11 : i64} {
  func.func @_conv_kernel(%arg0: i32, %arg1: memref<3x3xf32, #tpu.memory_space<smem>>, %arg2: memref<1xf32, #tpu.memory_space<smem>>, %arg3: memref<16x16x2xf32, #tpu.memory_space<vmem>>, %arg4: memref<14x14x2xf32, #tpu.memory_space<vmem>>) attributes {dimension_semantics = [#tpu.dimension_semantics<parallel>], iteration_bounds = array<i64: 1>, scalar_prefetch = 0 : i64, scratch_operands = 0 : i64, tpu.core_type = #tpu.core_type<tc>, window_params = [{transform_indices = @transform_0, window_bounds = array<i64: 3, 3>}, {transform_indices = @transform_1, window_bounds = array<i64: 1>}, {transform_indices = @transform_2, window_bounds = array<i64: 16, 16, 2>}, {transform_indices = @transform_3, window_bounds = array<i64: 14, 14, 2>}]} {
    %c0 = arith.constant 0 : index
    %c0_0 = arith.constant 0 : index
    %c0_1 = arith.constant 0 : index
    %0 = vector.load %arg3[%c0, %c0_0, %c0_1] : memref<16x16x2xf32, #tpu.memory_space<vmem>>, vector<16x16x2xf32>
    %c0_2 = arith.constant 0 : index
    %1 = memref.load %arg2[%c0_2] : memref<1xf32, #tpu.memory_space<smem>>
    %2 = vector.broadcast %1 : f32 to vector<14x14x2xf32>
    %3 = vector.extract_strided_slice %0 {offsets = [0, 0, 0], sizes = [16, 14, 2], strides = [1, 1, 1]} : vector<16x16x2xf32> to vector<16x14x2xf32>
    %c0_3 = arith.constant 0 : index
    %c0_4 = arith.constant 0 : index
    %4 = memref.load %arg1[%c0_3, %c0_4] : memref<3x3xf32, #tpu.memory_space<smem>>
    %5 = vector.extract_strided_slice %3 {offsets = [0, 0, 0], sizes = [14, 14, 2], strides = [1, 1, 1]} : vector<16x14x2xf32> to vector<14x14x2xf32>
    %6 = vector.broadcast %4 : f32 to vector<14x14x2xf32>
    %7 = arith.mulf %6, %5 : vector<14x14x2xf32>
    %8 = arith.addf %2, %7 : vector<14x14x2xf32>
    %c1 = arith.constant 1 : index
    %c0_5 = arith.constant 0 : index
    %9 = memref.load %arg1[%c1, %c0_5] : memref<3x3xf32, #tpu.memory_space<smem>>
    %10 = vector.extract_strided_slice %3 {offsets = [1, 0, 0], sizes = [14, 14, 2], strides = [1, 1, 1]} : vector<16x14x2xf32> to vector<14x14x2xf32>
    %11 = vector.broadcast %9 : f32 to vector<14x14x2xf32>
    %12 = arith.mulf %11, %10 : vector<14x14x2xf32>
    %13 = arith.addf %8, %12 : vector<14x14x2xf32>
    %c2 = arith.constant 2 : index
    %c0_6 = arith.constant 0 : index
    %14 = memref.load %arg1[%c2, %c0_6] : memref<3x3xf32, #tpu.memory_space<smem>>
    %15 = vector.extract_strided_slice %3 {offsets = [2, 0, 0], sizes = [14, 14, 2], strides = [1, 1, 1]} : vector<16x14x2xf32> to vector<14x14x2xf32>
    %16 = vector.broadcast %14 : f32 to vector<14x14x2xf32>
    %17 = arith.mulf %16, %15 : vector<14x14x2xf32>
    %18 = arith.addf %13, %17 : vector<14x14x2xf32>
    %19 = vector.extract_strided_slice %0 {offsets = [0, 1, 0], sizes = [16, 14, 2], strides = [1, 1, 1]} : vector<16x16x2xf32> to vector<16x14x2xf32>
    %c0_7 = arith.constant 0 : index
    %c1_8 = arith.constant 1 : index
    %20 = memref.load %arg1[%c0_7, %c1_8] : memref<3x3xf32, #tpu.memory_space<smem>>
    %21 = vector.extract_strided_slice %19 {offsets = [0, 0, 0], sizes = [14, 14, 2], strides = [1, 1, 1]} : vector<16x14x2xf32> to vector<14x14x2xf32>
    %22 = vector.broadcast %20 : f32 to vector<14x14x2xf32>
    %23 = arith.mulf %22, %21 : vector<14x14x2xf32>
    %24 = arith.addf %18, %23 : vector<14x14x2xf32>
    %c1_9 = arith.constant 1 : index
    %c1_10 = arith.constant 1 : index
    %25 = memref.load %arg1[%c1_9, %c1_10] : memref<3x3xf32, #tpu.memory_space<smem>>
    %26 = vector.extract_strided_slice %19 {offsets = [1, 0, 0], sizes = [14, 14, 2], strides = [1, 1, 1]} : vector<16x14x2xf32> to vector<14x14x2xf32>
    %27 = vector.broadcast %25 : f32 to vector<14x14x2xf32>
    %28 = arith.mulf %27, %26 : vector<14x14x2xf32>
    %29 = arith.addf %24, %28 : vector<14x14x2xf32>
    %c2_11 = arith.constant 2 : index
    %c1_12 = arith.constant 1 : index
    %30 = memref.load %arg1[%c2_11, %c1_12] : memref<3x3xf32, #tpu.memory_space<smem>>
    %31 = vector.extract_strided_slice %19 {offsets = [2, 0, 0], sizes = [14, 14, 2], strides = [1, 1, 1]} : vector<16x14x2xf32> to vector<14x14x2xf32>
    %32 = vector.broadcast %30 : f32 to vector<14x14x2xf32>
    %33 = arith.mulf %32, %31 : vector<14x14x2xf32>
    %34 = arith.addf %29, %33 : vector<14x14x2xf32>
    %35 = vector.extract_strided_slice %0 {offsets = [0, 2, 0], sizes = [16, 14, 2], strides = [1, 1, 1]} : vector<16x16x2xf32> to vector<16x14x2xf32>
    %c0_13 = arith.constant 0 : index
    %c2_14 = arith.constant 2 : index
    %36 = memref.load %arg1[%c0_13, %c2_14] : memref<3x3xf32, #tpu.memory_space<smem>>
    %37 = vector.extract_strided_slice %35 {offsets = [0, 0, 0], sizes = [14, 14, 2], strides = [1, 1, 1]} : vector<16x14x2xf32> to vector<14x14x2xf32>
    %38 = vector.broadcast %36 : f32 to vector<14x14x2xf32>
    %39 = arith.mulf %38, %37 : vector<14x14x2xf32>
    %40 = arith.addf %34, %39 : vector<14x14x2xf32>
    %c1_15 = arith.constant 1 : index
    %c2_16 = arith.constant 2 : index
    %41 = memref.load %arg1[%c1_15, %c2_16] : memref<3x3xf32, #tpu.memory_space<smem>>
    %42 = vector.extract_strided_slice %35 {offsets = [1, 0, 0], sizes = [14, 14, 2], strides = [1, 1, 1]} : vector<16x14x2xf32> to vector<14x14x2xf32>
    %43 = vector.broadcast %41 : f32 to vector<14x14x2xf32>
    %44 = arith.mulf %43, %42 : vector<14x14x2xf32>
    %45 = arith.addf %40, %44 : vector<14x14x2xf32>
    %c2_17 = arith.constant 2 : index
    %c2_18 = arith.constant 2 : index
    %46 = memref.load %arg1[%c2_17, %c2_18] : memref<3x3xf32, #tpu.memory_space<smem>>
    %47 = vector.extract_strided_slice %35 {offsets = [2, 0, 0], sizes = [14, 14, 2], strides = [1, 1, 1]} : vector<16x14x2xf32> to vector<14x14x2xf32>
    %48 = vector.broadcast %46 : f32 to vector<14x14x2xf32>
    %49 = arith.mulf %48, %47 : vector<14x14x2xf32>
    %50 = arith.addf %45, %49 : vector<14x14x2xf32>
    %c0_19 = arith.constant 0 : index
    %c0_20 = arith.constant 0 : index
    %c0_21 = arith.constant 0 : index
    %51 = vector.load %arg4[%c0_19, %c0_20, %c0_21] : memref<14x14x2xf32, #tpu.memory_space<vmem>>, vector<14x14x2xf32>
    tpu.vector_store %arg4[%c0_19, %c0_20, %c0_21], %50 {strides = array<i32>} : memref<14x14x2xf32, #tpu.memory_space<vmem>>, vector<14x14x2xf32>,
    return
  }
  func.func @transform_0(%arg0: i32) -> (i32, i32) {
    %c0_i32 = arith.constant 0 : i32
    %c0_i32_0 = arith.constant 0 : i32
    %c0_i32_1 = arith.constant 0 : i32
    return %c0_i32, %c0_i32_0 : i32, i32
  }
  func.func @transform_1(%arg0: i32) -> i32 {
    %c0_i32 = arith.constant 0 : i32
    %c0_i32_0 = arith.constant 0 : i32
    return %c0_i32 : i32
  }
  func.func @transform_2(%arg0: i32) -> (i32, i32, i32) {
    %c0_i32 = arith.constant 0 : i32
    %c0_i32_0 = arith.constant 0 : i32
    %c0_i32_1 = arith.constant 0 : i32
    return %c0_i32, %c0_i32_0, %arg0 : i32, i32, i32
  }
  func.func @transform_3(%arg0: i32) -> (i32, i32, i32) {
    %c0_i32 = arith.constant 0 : i32
    %c0_i32_0 = arith.constant 0 : i32
    %c0_i32_1 = arith.constant 0 : i32
    return %c0_i32, %c0_i32_0, %arg0 : i32, i32, i32
  }
}

</mosaic_0001>

<llo_original>
// kernel: conv2d_1x1ch_3x3.1
$region0: #{conv2d_1x1ch_3x3.1}
  #allocation0 [shape = 'u32[]', space=smem, size = 0x4, offset = 0x4, fixed_abs, tag = 'smem constant byte address 0x4 - core index']
  #allocation1 [shape = 'u32[144,128]{1,0:T(1,128)}', space=vmem, size = 0x12000, scoped, tag = 'internal scratch']
  #allocation2 [shape = 'f32[1]{0:T(128)S(6)}', space=smem, size = 0x200, scoped, tag = 'scoped memory for conv2d_1x1ch_3x3.1']
  %s0 = inlined_call_operand.vmem [shape: f32[3,3], index: 0, kind: input, shape index: {}]
  %s1 = inlined_call_operand.<no memory space> [shape: f32[1], index: 1, kind: input, shape index: {}]
  %s2 = inlined_call_operand.vmem [shape: f32[16,16,2], index: 2, kind: input, shape index: {}]
  %s3 = inlined_call_operand.vmem [shape: f32[14,14,2], index: 3, kind: output, shape index: {}]
  %s4 = sld [smem:[#allocation0]]
  $region26: #{conv2d_1x1ch_3x3.1} parent=0
    _
  %s6 = ssub.s32 1, %s4
  %s7 = scalar_select 0, %s6, %s4
  %8 = sst [smem:[#allocation2]] %s1
  $region1: #{conv2d_1x1ch_3x3.1} parent=0
    #allocation3 [shape = 'u8[2048]{0}', space=smem, size = 0x800, scoped, tag = 'input window, operand 0, single buffered']
    #allocation4 [shape = 's32[1]{0}', space=sflag, size = 0x4, scoped, tag = 'scoped memory for conv2d_1x1ch_3x3.1']
    %9 = vsyncpa [#allocation4], 0
    // Predicated region
    $region2: #{conv2d_1x1ch_3x3.1} parent=1 // pred_check
      _
    $region3: #{conv2d_1x1ch_3x3.1} parent=1 // pred_check_branch
      %11 = sbr.rel (0) target = $region5
    $region4: #{conv2d_1x1ch_3x3.1} parent=1 // pred_region
      %s13 = ssub.s32 64, 64
      %14 = vsyncadd [#allocation4], %s13
      %s16 = sshll.u32 %s0, 4
      %s17 = int_to_ptr.vmem [resolvable:$true] %s16
      %19 = dma.vmem_to_smem %s17, 64, [#allocation3], [#allocation4]
    $region5: #{conv2d_1x1ch_3x3.1} parent=1 // pred_fallthru
      _
    // Predicated region
    $region6: #{conv2d_1x1ch_3x3.1} parent=1 // pred_check
      _
    $region7: #{conv2d_1x1ch_3x3.1} parent=1 // pred_check_branch
      %21 = sbr.rel (0) target = $region9
    $region8: #{conv2d_1x1ch_3x3.1} parent=1 // pred_region
      _
    $region9: #{conv2d_1x1ch_3x3.1} parent=1 // pred_fallthru
      _
    // Predicated region
    $region10: #{conv2d_1x1ch_3x3.1} parent=1 // pred_check
      _
    $region11: #{conv2d_1x1ch_3x3.1} parent=1 // pred_check_branch
      %23 = sbr.rel (0) target = $region13
    $region12: #{conv2d_1x1ch_3x3.1} parent=1 // pred_region
      _
    $region13: #{conv2d_1x1ch_3x3.1} parent=1 // pred_fallthru
      _
    // Predicated region
    $region14: #{conv2d_1x1ch_3x3.1} parent=1 // pred_check
      _
    $region15: #{conv2d_1x1ch_3x3.1} parent=1 // pred_check_branch
      %25 = sbr.rel (0) target = $region17
    $region16: #{conv2d_1x1ch_3x3.1} parent=1 // pred_region
      %26 = dma.done [#allocation4], 64
    $region17: #{conv2d_1x1ch_3x3.1} parent=1 // pred_fallthru
      _
    %27 = sfence
    %v28 = vld [vmem:[%s2] sm:$0xff]
    %v29 = vld [vmem:[%s2 + $0x8] sm:$0xff]
    %v30 = vld [vmem:[%s2 + $0x10] sm:$0xff]
    %v31 = vld [vmem:[%s2 + $0x18] sm:$0xff]
    %v32 = vld [vmem:[%s2 + $0x20] sm:$0xff]
    %v33 = vld [vmem:[%s2 + $0x28] sm:$0xff]
    %v34 = vld [vmem:[%s2 + $0x30] sm:$0xff]
    %v35 = vld [vmem:[%s2 + $0x38] sm:$0xff]
    %v36 = vld [vmem:[%s2 + $0x40] sm:$0xff]
    %v37 = vld [vmem:[%s2 + $0x48] sm:$0xff]
    %v38 = vld [vmem:[%s2 + $0x50] sm:$0xff]
    %v39 = vld [vmem:[%s2 + $0x58] sm:$0xff]
    %v40 = vld [vmem:[%s2 + $0x60] sm:$0xff]
    %v41 = vld [vmem:[%s2 + $0x68] sm:$0xff]
    %v42 = vld [vmem:[%s2 + $0x70] sm:$0xff]
    %v43 = vld [vmem:[%s2 + $0x78] sm:$0xff]
    %v44 = vld [vmem:[%s2 + $0x80] sm:$0xff]
    %v45 = vld [vmem:[%s2 + $0x88] sm:$0xff]
    %v46 = vld [vmem:[%s2 + $0x90] sm:$0xff]
    %v47 = vld [vmem:[%s2 + $0x98] sm:$0xff]
    %v48 = vld [vmem:[%s2 + $0xa0] sm:$0xff]
    %v49 = vld [vmem:[%s2 + $0xa8] sm:$0xff]
    %v50 = vld [vmem:[%s2 + $0xb0] sm:$0xff]
    %v51 = vld [vmem:[%s2 + $0xb8] sm:$0xff]
    %v52 = vld [vmem:[%s2 + $0xc0] sm:$0xff]
    %v53 = vld [vmem:[%s2 + $0xc8] sm:$0xff]
    %v54 = vld [vmem:[%s2 + $0xd0] sm:$0xff]
    %v55 = vld [vmem:[%s2 + $0xd8] sm:$0xff]
    %v56 = vld [vmem:[%s2 + $0xe0] sm:$0xff]
    %v57 = vld [vmem:[%s2 + $0xe8] sm:$0xff]
    %v58 = vld [vmem:[%s2 + $0xf0] sm:$0xff]
    %v59 = vld [vmem:[%s2 + $0xf8] sm:$0xff]
    %s60 = sld [smem:[#allocation2]]
    %v61 = vstv %s60
    %s62 = sld [smem:[#allocation3]]
    %v63 = vstv %s62
    %v64 = vmul.f32 %v63, %v28
    %v65 = vmul.f32 %v63, %v29
    %v66 = vmul.f32 %v63, %v30
    %v67 = vmul.f32 %v63, %v31
    %v68 = vmul.f32 %v63, %v32
    %v69 = vmul.f32 %v63, %v33
    %v70 = vmul.f32 %v63, %v34
    %v71 = vmul.f32 %v63, %v35
    %v72 = vmul.f32 %v63, %v36
    %v73 = vmul.f32 %v63, %v37
    %v74 = vmul.f32 %v63, %v38
    %v75 = vmul.f32 %v63, %v39
    %v76 = vmul.f32 %v63, %v40
    %v77 = vmul.f32 %v63, %v41
    %v78 = vmul.f32 %v63, %v42
    %v79 = vmul.f32 %v63, %v43
    %v80 = vmul.f32 %v63, %v44
    %v81 = vmul.f32 %v63, %v45
    %v82 = vmul.f32 %v63, %v46
    %v83 = vmul.f32 %v63, %v47
    %v84 = vmul.f32 %v63, %v48
    %v85 = vmul.f32 %v63, %v49
    %v86 = vmul.f32 %v63, %v50
    %v87 = vmul.f32 %v63, %v51
    %v88 = vmul.f32 %v63, %v52
    %v89 = vmul.f32 %v63, %v53
    %v90 = vmul.f32 %v63, %v54
    %v91 = vmul.f32 %v63, %v55
    %v92 = vadd.f32 %v61, %v64
    %v93 = vadd.f32 %v61, %v65
    %v94 = vadd.f32 %v61, %v66
    %v95 = vadd.f32 %v61, %v67
    %v96 = vadd.f32 %v61, %v68
    %v97 = vadd.f32 %v61, %v69
    %v98 = vadd.f32 %v61, %v70
    %v99 = vadd.f32 %v61, %v71
    %v100 = vadd.f32 %v61, %v72
    %v101 = vadd.f32 %v61, %v73
    %v102 = vadd.f32 %v61, %v74
    %v103 = vadd.f32 %v61, %v75
    %v104 = vadd.f32 %v61, %v76
    %v105 = vadd.f32 %v61, %v77
    %v106 = vadd.f32 %v61, %v78
    %v107 = vadd.f32 %v61, %v79
    %v108 = vadd.f32 %v61, %v80
    %v109 = vadd.f32 %v61, %v81
    %v110 = vadd.f32 %v61, %v82
    %v111 = vadd.f32 %v61, %v83
    %v112 = vadd.f32 %v61, %v84
    %v113 = vadd.f32 %v61, %v85
    %v114 = vadd.f32 %v61, %v86
    %v115 = vadd.f32 %v61, %v87
    %v116 = vadd.f32 %v61, %v88
    %v117 = vadd.f32 %v61, %v89
    %v118 = vadd.f32 %v61, %v90
    %v119 = vadd.f32 %v61, %v91
    %s120 = sld [smem:[#allocation3 + $0x80]]
    %v121 = vstv %s120
    %v122 = vmul.f32 %v121, %v30
    %v123 = vmul.f32 %v121, %v31
    %v124 = vmul.f32 %v121, %v32
    %v125 = vmul.f32 %v121, %v33
    %v126 = vmul.f32 %v121, %v34
    %v127 = vmul.f32 %v121, %v35
    %v128 = vmul.f32 %v121, %v36
    %v129 = vmul.f32 %v121, %v37
    %v130 = vmul.f32 %v121, %v38
    %v131 = vmul.f32 %v121, %v39
    %v132 = vmul.f32 %v121, %v40
    %v133 = vmul.f32 %v121, %v41
    %v134 = vmul.f32 %v121, %v42
    %v135 = vmul.f32 %v121, %v43
    %v136 = vmul.f32 %v121, %v44
    %v137 = vmul.f32 %v121, %v45
    %v138 = vmul.f32 %v121, %v46
    %v139 = vmul.f32 %v121, %v47
    %v140 = vmul.f32 %v121, %v48
    %v141 = vmul.f32 %v121, %v49
    %v142 = vmul.f32 %v121, %v50
    %v143 = vmul.f32 %v121, %v51
    %v144 = vmul.f32 %v121, %v52
    %v145 = vmul.f32 %v121, %v53
    %v146 = vmul.f32 %v121, %v54
    %v147 = vmul.f32 %v121, %v55
    %v148 = vmul.f32 %v121, %v56
    %v149 = vmul.f32 %v121, %v57
    %v150 = vadd.f32 %v92, %v122
    %v151 = vadd.f32 %v93, %v123
    %v152 = vadd.f32 %v94, %v124
    %v153 = vadd.f32 %v95, %v125
    %v154 = vadd.f32 %v96, %v126
    %v155 = vadd.f32 %v97, %v127
    %v156 = vadd.f32 %v98, %v128
    %v157 = vadd.f32 %v99, %v129
    %v158 = vadd.f32 %v100, %v130
    %v159 = vadd.f32 %v101, %v131
    %v160 = vadd.f32 %v102, %v132
    %v161 = vadd.f32 %v103, %v133
    %v162 = vadd.f32 %v104, %v134
    %v163 = vadd.f32 %v105, %v135
    %v164 = vadd.f32 %v106, %v136
    %v165 = vadd.f32 %v107, %v137
    %v166 = vadd.f32 %v108, %v138
    %v167 = vadd.f32 %v109, %v139
    %v168 = vadd.f32 %v110, %v140
    %v169 = vadd.f32 %v111, %v141
    %v170 = vadd.f32 %v112, %v142
    %v171 = vadd.f32 %v113, %v143
    %v172 = vadd.f32 %v114, %v144
    %v173 = vadd.f32 %v115, %v145
    %v174 = vadd.f32 %v116, %v146
    %v175 = vadd.f32 %v117, %v147
    %v176 = vadd.f32 %v118, %v148
    %v177 = vadd.f32 %v119, %v149
    %s178 = sld [smem:[#allocation3 + $0x100]]
    %v179 = vstv %s178
    %v180 = vmul.f32 %v179, %v32
    %v181 = vmul.f32 %v179, %v33
    %v182 = vmul.f32 %v179, %v34
    %v183 = vmul.f32 %v179, %v35
    %v184 = vmul.f32 %v179, %v36
    %v185 = vmul.f32 %v179, %v37
    %v186 = vmul.f32 %v179, %v38
    %v187 = vmul.f32 %v179, %v39
    %v188 = vmul.f32 %v179, %v40
    %v189 = vmul.f32 %v179, %v41
    %v190 = vmul.f32 %v179, %v42
    %v191 = vmul.f32 %v179, %v43
    %v192 = vmul.f32 %v179, %v44
    %v193 = vmul.f32 %v179, %v45
    %v194 = vmul.f32 %v179, %v46
    %v195 = vmul.f32 %v179, %v47
    %v196 = vmul.f32 %v179, %v48
    %v197 = vmul.f32 %v179, %v49
    %v198 = vmul.f32 %v179, %v50
    %v199 = vmul.f32 %v179, %v51
    %v200 = vmul.f32 %v179, %v52
    %v201 = vmul.f32 %v179, %v53
    %v202 = vmul.f32 %v179, %v54
    %v203 = vmul.f32 %v179, %v55
    %v204 = vmul.f32 %v179, %v56
    %v205 = vmul.f32 %v179, %v57
    %v206 = vmul.f32 %v179, %v58
    %v207 = vmul.f32 %v179, %v59
    %v208 = vadd.f32 %v150, %v180
    %v209 = vadd.f32 %v151, %v181
    %v210 = vadd.f32 %v152, %v182
    %v211 = vadd.f32 %v153, %v183
    %v212 = vadd.f32 %v154, %v184
    %v213 = vadd.f32 %v155, %v185
    %v214 = vadd.f32 %v156, %v186
    %v215 = vadd.f32 %v157, %v187
    %v216 = vadd.f32 %v158, %v188
    %v217 = vadd.f32 %v159, %v189
    %v218 = vadd.f32 %v160, %v190
    %v219 = vadd.f32 %v161, %v191
    %v220 = vadd.f32 %v162, %v192
    %v221 = vadd.f32 %v163, %v193
    %v222 = vadd.f32 %v164, %v194
    %v223 = vadd.f32 %v165, %v195
    %v224 = vadd.f32 %v166, %v196
    %v225 = vadd.f32 %v167, %v197
    %v226 = vadd.f32 %v168, %v198
    %v227 = vadd.f32 %v169, %v199
    %v228 = vadd.f32 %v170, %v200
    %v229 = vadd.f32 %v171, %v201
    %v230 = vadd.f32 %v172, %v202
    %v231 = vadd.f32 %v173, %v203
    %v232 = vadd.f32 %v174, %v204
    %v233 = vadd.f32 %v175, %v205
    %v234 = vadd.f32 %v176, %v206
    %v235 = vadd.f32 %v177, %v207
    %s236 = sld [smem:[#allocation3 + $0x1]]
    %v237 = vstv %s236
    %v238 = vmul.f32 %v237, %v28
    %v239 = vmul.f32 %v237, %v29
    %v240 = vmul.f32 %v237, %v30
    %v241 = vmul.f32 %v237, %v31
    %v242 = vmul.f32 %v237, %v32
    %v243 = vmul.f32 %v237, %v33
    %v244 = vmul.f32 %v237, %v34
    %v245 = vmul.f32 %v237, %v35
    %v246 = vmul.f32 %v237, %v36
    %v247 = vmul.f32 %v237, %v37
    %v248 = vmul.f32 %v237, %v38
    %v249 = vmul.f32 %v237, %v39
    %v250 = vmul.f32 %v237, %v40
    %v251 = vmul.f32 %v237, %v41
    %v252 = vmul.f32 %v237, %v42
    %v253 = vmul.f32 %v237, %v43
    %v254 = vmul.f32 %v237, %v44
    %v255 = vmul.f32 %v237, %v45
    %v256 = vmul.f32 %v237, %v46
    %v257 = vmul.f32 %v237, %v47
    %v258 = vmul.f32 %v237, %v48
    %v259 = vmul.f32 %v237, %v49
    %v260 = vmul.f32 %v237, %v50
    %v261 = vmul.f32 %v237, %v51
    %v262 = vmul.f32 %v237, %v52
    %v263 = vmul.f32 %v237, %v53
    %v264 = vmul.f32 %v237, %v54
    %v265 = vmul.f32 %v237, %v55
    %vm294 = vcmask 1046528
    %v295 = vrot.slane %v238, 1
    %v296 = vrot.slane %v239, 1
    %v297 = vsel %vm294, %v295, %v296
    %v298 = vrot.slane %v240, 1
    %v299 = vrot.slane %v241, 1
    %v300 = vsel %vm294, %v298, %v299
    %v301 = vrot.slane %v242, 1
    %v302 = vrot.slane %v243, 1
    %v303 = vsel %vm294, %v301, %v302
    %v304 = vrot.slane %v244, 1
    %v305 = vrot.slane %v245, 1
    %v306 = vsel %vm294, %v304, %v305
    %v307 = vrot.slane %v246, 1
    %v308 = vrot.slane %v247, 1
    %v309 = vsel %vm294, %v307, %v308
    %v310 = vrot.slane %v248, 1
    %v311 = vrot.slane %v249, 1
    %v312 = vsel %vm294, %v310, %v311
    %v313 = vrot.slane %v250, 1
    %v314 = vrot.slane %v251, 1
    %v315 = vsel %vm294, %v313, %v314
    %v316 = vrot.slane %v252, 1
    %v317 = vrot.slane %v253, 1
    %v318 = vsel %vm294, %v316, %v317
    %v319 = vrot.slane %v254, 1
    %v320 = vrot.slane %v255, 1
    %v321 = vsel %vm294, %v319, %v320
    %v322 = vrot.slane %v256, 1
    %v323 = vrot.slane %v257, 1
    %v324 = vsel %vm294, %v322, %v323
    %v325 = vrot.slane %v258, 1
    %v326 = vrot.slane %v259, 1
    %v327 = vsel %vm294, %v325, %v326
    %v328 = vrot.slane %v260, 1
    %v329 = vrot.slane %v261, 1
    %v330 = vsel %vm294, %v328, %v329
    %v331 = vrot.slane %v262, 1
    %v332 = vrot.slane %v263, 1
    %v333 = vsel %vm294, %v331, %v332
    %v334 = vrot.slane %v264, 1
    %v335 = vrot.slane %v265, 1
    %v336 = vsel %vm294, %v334, %v335
    %v365 = vadd.f32 %v208, %v297
    %v366 = vadd.f32 %v209, %v296
    %v367 = vadd.f32 %v210, %v300
    %v368 = vadd.f32 %v211, %v299
    %v369 = vadd.f32 %v212, %v303
    %v370 = vadd.f32 %v213, %v302
    %v371 = vadd.f32 %v214, %v306
    %v372 = vadd.f32 %v215, %v305
    %v373 = vadd.f32 %v216, %v309
    %v374 = vadd.f32 %v217, %v308
    %v375 = vadd.f32 %v218, %v312
    %v376 = vadd.f32 %v219, %v311
    %v377 = vadd.f32 %v220, %v315
    %v378 = vadd.f32 %v221, %v314
    %v379 = vadd.f32 %v222, %v318
    %v380 = vadd.f32 %v223, %v317
    %v381 = vadd.f32 %v224, %v321
    %v382 = vadd.f32 %v225, %v320
    %v383 = vadd.f32 %v226, %v324
    %v384 = vadd.f32 %v227, %v323
    %v385 = vadd.f32 %v228, %v327
    %v386 = vadd.f32 %v229, %v326
    %v387 = vadd.f32 %v230, %v330
    %v388 = vadd.f32 %v231, %v329
    %v389 = vadd.f32 %v232, %v333
    %v390 = vadd.f32 %v233, %v332
    %v391 = vadd.f32 %v234, %v336
    %v392 = vadd.f32 %v235, %v335
    %s393 = sld [smem:[#allocation3 + $0x81]]
    %v394 = vstv %s393
    %v395 = vmul.f32 %v394, %v30
    %v396 = vmul.f32 %v394, %v31
    %v397 = vmul.f32 %v394, %v32
    %v398 = vmul.f32 %v394, %v33
    %v399 = vmul.f32 %v394, %v34
    %v400 = vmul.f32 %v394, %v35
    %v401 = vmul.f32 %v394, %v36
    %v402 = vmul.f32 %v394, %v37
    %v403 = vmul.f32 %v394, %v38
    %v404 = vmul.f32 %v394, %v39
    %v405 = vmul.f32 %v394, %v40
    %v406 = vmul.f32 %v394, %v41
    %v407 = vmul.f32 %v394, %v42
    %v408 = vmul.f32 %v394, %v43
    %v409 = vmul.f32 %v394, %v44
    %v410 = vmul.f32 %v394, %v45
    %v411 = vmul.f32 %v394, %v46
    %v412 = vmul.f32 %v394, %v47
    %v413 = vmul.f32 %v394, %v48
    %v414 = vmul.f32 %v394, %v49
    %v415 = vmul.f32 %v394, %v50
    %v416 = vmul.f32 %v394, %v51
    %v417 = vmul.f32 %v394, %v52
    %v418 = vmul.f32 %v394, %v53
    %v419 = vmul.f32 %v394, %v54
    %v420 = vmul.f32 %v394, %v55
    %v421 = vmul.f32 %v394, %v56
    %v422 = vmul.f32 %v394, %v57
    %v451 = vrot.slane %v395, 1
    %v452 = vrot.slane %v396, 1
    %v453 = vsel %vm294, %v451, %v452
    %v454 = vrot.slane %v397, 1
    %v455 = vrot.slane %v398, 1
    %v456 = vsel %vm294, %v454, %v455
    %v457 = vrot.slane %v399, 1
    %v458 = vrot.slane %v400, 1
    %v459 = vsel %vm294, %v457, %v458
    %v460 = vrot.slane %v401, 1
    %v461 = vrot.slane %v402, 1
    %v462 = vsel %vm294, %v460, %v461
    %v463 = vrot.slane %v403, 1
    %v464 = vrot.slane %v404, 1
    %v465 = vsel %vm294, %v463, %v464
    %v466 = vrot.slane %v405, 1
    %v467 = vrot.slane %v406, 1
    %v468 = vsel %vm294, %v466, %v467
    %v469 = vrot.slane %v407, 1
    %v470 = vrot.slane %v408, 1
    %v471 = vsel %vm294, %v469, %v470
    %v472 = vrot.slane %v409, 1
    %v473 = vrot.slane %v410, 1
    %v474 = vsel %vm294, %v472, %v473
    %v475 = vrot.slane %v411, 1
    %v476 = vrot.slane %v412, 1
    %v477 = vsel %vm294, %v475, %v476
    %v478 = vrot.slane %v413, 1
    %v479 = vrot.slane %v414, 1
    %v480 = vsel %vm294, %v478, %v479
    %v481 = vrot.slane %v415, 1
    %v482 = vrot.slane %v416, 1
    %v483 = vsel %vm294, %v481, %v482
    %v484 = vrot.slane %v417, 1
    %v485 = vrot.slane %v418, 1
    %v486 = vsel %vm294, %v484, %v485
    %v487 = vrot.slane %v419, 1
    %v488 = vrot.slane %v420, 1
    %v489 = vsel %vm294, %v487, %v488
    %v490 = vrot.slane %v421, 1
    %v491 = vrot.slane %v422, 1
    %v492 = vsel %vm294, %v490, %v491
    %v521 = vadd.f32 %v365, %v453
    %v522 = vadd.f32 %v366, %v452
    %v523 = vadd.f32 %v367, %v456
    %v524 = vadd.f32 %v368, %v455
    %v525 = vadd.f32 %v369, %v459
    %v526 = vadd.f32 %v370, %v458
    %v527 = vadd.f32 %v371, %v462
    %v528 = vadd.f32 %v372, %v461
    %v529 = vadd.f32 %v373, %v465
    %v530 = vadd.f32 %v374, %v464
    %v531 = vadd.f32 %v375, %v468
    %v532 = vadd.f32 %v376, %v467
    %v533 = vadd.f32 %v377, %v471
    %v534 = vadd.f32 %v378, %v470
    %v535 = vadd.f32 %v379, %v474
    %v536 = vadd.f32 %v380, %v473
    %v537 = vadd.f32 %v381, %v477
    %v538 = vadd.f32 %v382, %v476
    %v539 = vadd.f32 %v383, %v480
    %v540 = vadd.f32 %v384, %v479
    %v541 = vadd.f32 %v385, %v483
    %v542 = vadd.f32 %v386, %v482
    %v543 = vadd.f32 %v387, %v486
    %v544 = vadd.f32 %v388, %v485
    %v545 = vadd.f32 %v389, %v489
    %v546 = vadd.f32 %v390, %v488
    %v547 = vadd.f32 %v391, %v492
    %v548 = vadd.f32 %v392, %v491
    %s549 = sld [smem:[#allocation3 + $0x101]]
    %v550 = vstv %s549
    %v551 = vmul.f32 %v550, %v32
    %v552 = vmul.f32 %v550, %v33
    %v553 = vmul.f32 %v550, %v34
    %v554 = vmul.f32 %v550, %v35
    %v555 = vmul.f32 %v550, %v36
    %v556 = vmul.f32 %v550, %v37
    %v557 = vmul.f32 %v550, %v38
    %v558 = vmul.f32 %v550, %v39
    %v559 = vmul.f32 %v550, %v40
    %v560 = vmul.f32 %v550, %v41
    %v561 = vmul.f32 %v550, %v42
    %v562 = vmul.f32 %v550, %v43
    %v563 = vmul.f32 %v550, %v44
    %v564 = vmul.f32 %v550, %v45
    %v565 = vmul.f32 %v550, %v46
    %v566 = vmul.f32 %v550, %v47
    %v567 = vmul.f32 %v550, %v48
    %v568 = vmul.f32 %v550, %v49
    %v569 = vmul.f32 %v550, %v50
    %v570 = vmul.f32 %v550, %v51
    %v571 = vmul.f32 %v550, %v52
    %v572 = vmul.f32 %v550, %v53
    %v573 = vmul.f32 %v550, %v54
    %v574 = vmul.f32 %v550, %v55
    %v575 = vmul.f32 %v550, %v56
    %v576 = vmul.f32 %v550, %v57
    %v577 = vmul.f32 %v550, %v58
    %v578 = vmul.f32 %v550, %v59
    %v607 = vrot.slane %v551, 1
    %v608 = vrot.slane %v552, 1
    %v609 = vsel %vm294, %v607, %v608
    %v610 = vrot.slane %v553, 1
    %v611 = vrot.slane %v554, 1
    %v612 = vsel %vm294, %v610, %v611
    %v613 = vrot.slane %v555, 1
    %v614 = vrot.slane %v556, 1
    %v615 = vsel %vm294, %v613, %v614
    %v616 = vrot.slane %v557, 1
    %v617 = vrot.slane %v558, 1
    %v618 = vsel %vm294, %v616, %v617
    %v619 = vrot.slane %v559, 1
    %v620 = vrot.slane %v560, 1
    %v621 = vsel %vm294, %v619, %v620
    %v622 = vrot.slane %v561, 1
    %v623 = vrot.slane %v562, 1
    %v624 = vsel %vm294, %v622, %v623
    %v625 = vrot.slane %v563, 1
    %v626 = vrot.slane %v564, 1
    %v627 = vsel %vm294, %v625, %v626
    %v628 = vrot.slane %v565, 1
    %v629 = vrot.slane %v566, 1
    %v630 = vsel %vm294, %v628, %v629
    %v631 = vrot.slane %v567, 1
    %v632 = vrot.slane %v568, 1
    %v633 = vsel %vm294, %v631, %v632
    %v634 = vrot.slane %v569, 1
    %v635 = vrot.slane %v570, 1
    %v636 = vsel %vm294, %v634, %v635
    %v637 = vrot.slane %v571, 1
    %v638 = vrot.slane %v572, 1
    %v639 = vsel %vm294, %v637, %v638
    %v640 = vrot.slane %v573, 1
    %v641 = vrot.slane %v574, 1
    %v642 = vsel %vm294, %v640, %v641
    %v643 = vrot.slane %v575, 1
    %v644 = vrot.slane %v576, 1
    %v645 = vsel %vm294, %v643, %v644
    %v646 = vrot.slane %v577, 1
    %v647 = vrot.slane %v578, 1
    %v648 = vsel %vm294, %v646, %v647
    %v677 = vadd.f32 %v521, %v609
    %v678 = vadd.f32 %v522, %v608
    %v679 = vadd.f32 %v523, %v612
    %v680 = vadd.f32 %v524, %v611
    %v681 = vadd.f32 %v525, %v615
    %v682 = vadd.f32 %v526, %v614
    %v683 = vadd.f32 %v527, %v618
    %v684 = vadd.f32 %v528, %v617
    %v685 = vadd.f32 %v529, %v621
    %v686 = vadd.f32 %v530, %v620
    %v687 = vadd.f32 %v531, %v624
    %v688 = vadd.f32 %v532, %v623
    %v689 = vadd.f32 %v533, %v627
    %v690 = vadd.f32 %v534, %v626
    %v691 = vadd.f32 %v535, %v630
    %v692 = vadd.f32 %v536, %v629
    %v693 = vadd.f32 %v537, %v633
    %v694 = vadd.f32 %v538, %v632
    %v695 = vadd.f32 %v539, %v636
    %v696 = vadd.f32 %v540, %v635
    %v697 = vadd.f32 %v541, %v639
    %v698 = vadd.f32 %v542, %v638
    %v699 = vadd.f32 %v543, %v642
    %v700 = vadd.f32 %v544, %v641
    %v701 = vadd.f32 %v545, %v645
    %v702 = vadd.f32 %v546, %v644
    %v703 = vadd.f32 %v547, %v648
    %v704 = vadd.f32 %v548, %v647
    %s705 = sld [smem:[#allocation3 + $0x2]]
    %v706 = vstv %s705
    %v707 = vmul.f32 %v706, %v28
    %v708 = vmul.f32 %v706, %v29
    %v709 = vmul.f32 %v706, %v30
    %v710 = vmul.f32 %v706, %v31
    %v711 = vmul.f32 %v706, %v32
    %v712 = vmul.f32 %v706, %v33
    %v713 = vmul.f32 %v706, %v34
    %v714 = vmul.f32 %v706, %v35
    %v715 = vmul.f32 %v706, %v36
    %v716 = vmul.f32 %v706, %v37
    %v717 = vmul.f32 %v706, %v38
    %v718 = vmul.f32 %v706, %v39
    %v719 = vmul.f32 %v706, %v40
    %v720 = vmul.f32 %v706, %v41
    %v721 = vmul.f32 %v706, %v42
    %v722 = vmul.f32 %v706, %v43
    %v723 = vmul.f32 %v706, %v44
    %v724 = vmul.f32 %v706, %v45
    %v725 = vmul.f32 %v706, %v46
    %v726 = vmul.f32 %v706, %v47
    %v727 = vmul.f32 %v706, %v48
    %v728 = vmul.f32 %v706, %v49
    %v729 = vmul.f32 %v706, %v50
    %v730 = vmul.f32 %v706, %v51
    %v731 = vmul.f32 %v706, %v52
    %v732 = vmul.f32 %v706, %v53
    %v733 = vmul.f32 %v706, %v54
    %v734 = vmul.f32 %v706, %v55
    %vm763 = vcmask 1045504
    %v764 = vrot.slane %v707, 2
    %v765 = vrot.slane %v708, 2
    %v766 = vsel %vm763, %v764, %v765
    %v767 = vrot.slane %v709, 2
    %v768 = vrot.slane %v710, 2
    %v769 = vsel %vm763, %v767, %v768
    %v770 = vrot.slane %v711, 2
    %v771 = vrot.slane %v712, 2
    %v772 = vsel %vm763, %v770, %v771
    %v773 = vrot.slane %v713, 2
    %v774 = vrot.slane %v714, 2
    %v775 = vsel %vm763, %v773, %v774
    %v776 = vrot.slane %v715, 2
    %v777 = vrot.slane %v716, 2
    %v778 = vsel %vm763, %v776, %v777
    %v779 = vrot.slane %v717, 2
    %v780 = vrot.slane %v718, 2
    %v781 = vsel %vm763, %v779, %v780
    %v782 = vrot.slane %v719, 2
    %v783 = vrot.slane %v720, 2
    %v784 = vsel %vm763, %v782, %v783
    %v785 = vrot.slane %v721, 2
    %v786 = vrot.slane %v722, 2
    %v787 = vsel %vm763, %v785, %v786
    %v788 = vrot.slane %v723, 2
    %v789 = vrot.slane %v724, 2
    %v790 = vsel %vm763, %v788, %v789
    %v791 = vrot.slane %v725, 2
    %v792 = vrot.slane %v726, 2
    %v793 = vsel %vm763, %v791, %v792
    %v794 = vrot.slane %v727, 2
    %v795 = vrot.slane %v728, 2
    %v796 = vsel %vm763, %v794, %v795
    %v797 = vrot.slane %v729, 2
    %v798 = vrot.slane %v730, 2
    %v799 = vsel %vm763, %v797, %v798
    %v800 = vrot.slane %v731, 2
    %v801 = vrot.slane %v732, 2
    %v802 = vsel %vm763, %v800, %v801
    %v803 = vrot.slane %v733, 2
    %v804 = vrot.slane %v734, 2
    %v805 = vsel %vm763, %v803, %v804
    %v834 = vadd.f32 %v677, %v766
    %v835 = vadd.f32 %v678, %v765
    %v836 = vadd.f32 %v679, %v769
    %v837 = vadd.f32 %v680, %v768
    %v838 = vadd.f32 %v681, %v772
    %v839 = vadd.f32 %v682, %v771
    %v840 = vadd.f32 %v683, %v775
    %v841 = vadd.f32 %v684, %v774
    %v842 = vadd.f32 %v685, %v778
    %v843 = vadd.f32 %v686, %v777
    %v844 = vadd.f32 %v687, %v781
    %v845 = vadd.f32 %v688, %v780
    %v846 = vadd.f32 %v689, %v784
    %v847 = vadd.f32 %v690, %v783
    %v848 = vadd.f32 %v691, %v787
    %v849 = vadd.f32 %v692, %v786
    %v850 = vadd.f32 %v693, %v790
    %v851 = vadd.f32 %v694, %v789
    %v852 = vadd.f32 %v695, %v793
    %v853 = vadd.f32 %v696, %v792
    %v854 = vadd.f32 %v697, %v796
    %v855 = vadd.f32 %v698, %v795
    %v856 = vadd.f32 %v699, %v799
    %v857 = vadd.f32 %v700, %v798
    %v858 = vadd.f32 %v701, %v802
    %v859 = vadd.f32 %v702, %v801
    %v860 = vadd.f32 %v703, %v805
    %v861 = vadd.f32 %v704, %v804
    %s862 = sld [smem:[#allocation3 + $0x82]]
    %v863 = vstv %s862
    %v864 = vmul.f32 %v863, %v30
    %v865 = vmul.f32 %v863, %v31
    %v866 = vmul.f32 %v863, %v32
    %v867 = vmul.f32 %v863, %v33
    %v868 = vmul.f32 %v863, %v34
    %v869 = vmul.f32 %v863, %v35
    %v870 = vmul.f32 %v863, %v36
    %v871 = vmul.f32 %v863, %v37
    %v872 = vmul.f32 %v863, %v38
    %v873 = vmul.f32 %v863, %v39
    %v874 = vmul.f32 %v863, %v40
    %v875 = vmul.f32 %v863, %v41
    %v876 = vmul.f32 %v863, %v42
    %v877 = vmul.f32 %v863, %v43
    %v878 = vmul.f32 %v863, %v44
    %v879 = vmul.f32 %v863, %v45
    %v880 = vmul.f32 %v863, %v46
    %v881 = vmul.f32 %v863, %v47
    %v882 = vmul.f32 %v863, %v48
    %v883 = vmul.f32 %v863, %v49
    %v884 = vmul.f32 %v863, %v50
    %v885 = vmul.f32 %v863, %v51
    %v886 = vmul.f32 %v863, %v52
    %v887 = vmul.f32 %v863, %v53
    %v888 = vmul.f32 %v863, %v54
    %v889 = vmul.f32 %v863, %v55
    %v890 = vmul.f32 %v863, %v56
    %v891 = vmul.f32 %v863, %v57
    %v920 = vrot.slane %v864, 2
    %v921 = vrot.slane %v865, 2
    %v922 = vsel %vm763, %v920, %v921
    %v923 = vrot.slane %v866, 2
    %v924 = vrot.slane %v867, 2
    %v925 = vsel %vm763, %v923, %v924
    %v926 = vrot.slane %v868, 2
    %v927 = vrot.slane %v869, 2
    %v928 = vsel %vm763, %v926, %v927
    %v929 = vrot.slane %v870, 2
    %v930 = vrot.slane %v871, 2
    %v931 = vsel %vm763, %v929, %v930
    %v932 = vrot.slane %v872, 2
    %v933 = vrot.slane %v873, 2
    %v934 = vsel %vm763, %v932, %v933
    %v935 = vrot.slane %v874, 2
    %v936 = vrot.slane %v875, 2
    %v937 = vsel %vm763, %v935, %v936
    %v938 = vrot.slane %v876, 2
    %v939 = vrot.slane %v877, 2
    %v940 = vsel %vm763, %v938, %v939
    %v941 = vrot.slane %v878, 2
    %v942 = vrot.slane %v879, 2
    %v943 = vsel %vm763, %v941, %v942
    %v944 = vrot.slane %v880, 2
    %v945 = vrot.slane %v881, 2
    %v946 = vsel %vm763, %v944, %v945
    %v947 = vrot.slane %v882, 2
    %v948 = vrot.slane %v883, 2
    %v949 = vsel %vm763, %v947, %v948
    %v950 = vrot.slane %v884, 2
    %v951 = vrot.slane %v885, 2
    %v952 = vsel %vm763, %v950, %v951
    %v953 = vrot.slane %v886, 2
    %v954 = vrot.slane %v887, 2
    %v955 = vsel %vm763, %v953, %v954
    %v956 = vrot.slane %v888, 2
    %v957 = vrot.slane %v889, 2
    %v958 = vsel %vm763, %v956, %v957
    %v959 = vrot.slane %v890, 2
    %v960 = vrot.slane %v891, 2
    %v961 = vsel %vm763, %v959, %v960
    %v990 = vadd.f32 %v834, %v922
    %v991 = vadd.f32 %v835, %v921
    %v992 = vadd.f32 %v836, %v925
    %v993 = vadd.f32 %v837, %v924
    %v994 = vadd.f32 %v838, %v928
    %v995 = vadd.f32 %v839, %v927
    %v996 = vadd.f32 %v840, %v931
    %v997 = vadd.f32 %v841, %v930
    %v998 = vadd.f32 %v842, %v934
    %v999 = vadd.f32 %v843, %v933
    %v1000 = vadd.f32 %v844, %v937
    %v1001 = vadd.f32 %v845, %v936
    %v1002 = vadd.f32 %v846, %v940
    %v1003 = vadd.f32 %v847, %v939
    %v1004 = vadd.f32 %v848, %v943
    %v1005 = vadd.f32 %v849, %v942
    %v1006 = vadd.f32 %v850, %v946
    %v1007 = vadd.f32 %v851, %v945
    %v1008 = vadd.f32 %v852, %v949
    %v1009 = vadd.f32 %v853, %v948
    %v1010 = vadd.f32 %v854, %v952
    %v1011 = vadd.f32 %v855, %v951
    %v1012 = vadd.f32 %v856, %v955
    %v1013 = vadd.f32 %v857, %v954
    %v1014 = vadd.f32 %v858, %v958
    %v1015 = vadd.f32 %v859, %v957
    %v1016 = vadd.f32 %v860, %v961
    %v1017 = vadd.f32 %v861, %v960
    %s1018 = sld [smem:[#allocation3 + $0x102]]
    %v1019 = vstv %s1018
    %v1020 = vmul.f32 %v1019, %v32
    %v1021 = vmul.f32 %v1019, %v33
    %v1022 = vmul.f32 %v1019, %v34
    %v1023 = vmul.f32 %v1019, %v35
    %v1024 = vmul.f32 %v1019, %v36
    %v1025 = vmul.f32 %v1019, %v37
    %v1026 = vmul.f32 %v1019, %v38
    %v1027 = vmul.f32 %v1019, %v39
    %v1028 = vmul.f32 %v1019, %v40
    %v1029 = vmul.f32 %v1019, %v41
    %v1030 = vmul.f32 %v1019, %v42
    %v1031 = vmul.f32 %v1019, %v43
    %v1032 = vmul.f32 %v1019, %v44
    %v1033 = vmul.f32 %v1019, %v45
    %v1034 = vmul.f32 %v1019, %v46
    %v1035 = vmul.f32 %v1019, %v47
    %v1036 = vmul.f32 %v1019, %v48
    %v1037 = vmul.f32 %v1019, %v49
    %v1038 = vmul.f32 %v1019, %v50
    %v1039 = vmul.f32 %v1019, %v51
    %v1040 = vmul.f32 %v1019, %v52
    %v1041 = vmul.f32 %v1019, %v53
    %v1042 = vmul.f32 %v1019, %v54
    %v1043 = vmul.f32 %v1019, %v55
    %v1044 = vmul.f32 %v1019, %v56
    %v1045 = vmul.f32 %v1019, %v57
    %v1046 = vmul.f32 %v1019, %v58
    %v1047 = vmul.f32 %v1019, %v59
    %v1076 = vrot.slane %v1020, 2
    %v1077 = vrot.slane %v1021, 2
    %v1078 = vsel %vm763, %v1076, %v1077
    %v1079 = vrot.slane %v1022, 2
    %v1080 = vrot.slane %v1023, 2
    %v1081 = vsel %vm763, %v1079, %v1080
    %v1082 = vrot.slane %v1024, 2
    %v1083 = vrot.slane %v1025, 2
    %v1084 = vsel %vm763, %v1082, %v1083
    %v1085 = vrot.slane %v1026, 2
    %v1086 = vrot.slane %v1027, 2
    %v1087 = vsel %vm763, %v1085, %v1086
    %v1088 = vrot.slane %v1028, 2
    %v1089 = vrot.slane %v1029, 2
    %v1090 = vsel %vm763, %v1088, %v1089
    %v1091 = vrot.slane %v1030, 2
    %v1092 = vrot.slane %v1031, 2
    %v1093 = vsel %vm763, %v1091, %v1092
    %v1094 = vrot.slane %v1032, 2
    %v1095 = vrot.slane %v1033, 2
    %v1096 = vsel %vm763, %v1094, %v1095
    %v1097 = vrot.slane %v1034, 2
    %v1098 = vrot.slane %v1035, 2
    %v1099 = vsel %vm763, %v1097, %v1098
    %v1100 = vrot.slane %v1036, 2
    %v1101 = vrot.slane %v1037, 2
    %v1102 = vsel %vm763, %v1100, %v1101
    %v1103 = vrot.slane %v1038, 2
    %v1104 = vrot.slane %v1039, 2
    %v1105 = vsel %vm763, %v1103, %v1104
    %v1106 = vrot.slane %v1040, 2
    %v1107 = vrot.slane %v1041, 2
    %v1108 = vsel %vm763, %v1106, %v1107
    %v1109 = vrot.slane %v1042, 2
    %v1110 = vrot.slane %v1043, 2
    %v1111 = vsel %vm763, %v1109, %v1110
    %v1112 = vrot.slane %v1044, 2
    %v1113 = vrot.slane %v1045, 2
    %v1114 = vsel %vm763, %v1112, %v1113
    %v1115 = vrot.slane %v1046, 2
    %v1116 = vrot.slane %v1047, 2
    %v1117 = vsel %vm763, %v1115, %v1116
    %v1146 = vadd.f32 %v990, %v1078
    %v1147 = vadd.f32 %v991, %v1077
    %v1148 = vadd.f32 %v992, %v1081
    %v1149 = vadd.f32 %v993, %v1080
    %v1150 = vadd.f32 %v994, %v1084
    %v1151 = vadd.f32 %v995, %v1083
    %v1152 = vadd.f32 %v996, %v1087
    %v1153 = vadd.f32 %v997, %v1086
    %v1154 = vadd.f32 %v998, %v1090
    %v1155 = vadd.f32 %v999, %v1089
    %v1156 = vadd.f32 %v1000, %v1093
    %v1157 = vadd.f32 %v1001, %v1092
    %v1158 = vadd.f32 %v1002, %v1096
    %v1159 = vadd.f32 %v1003, %v1095
    %v1160 = vadd.f32 %v1004, %v1099
    %v1161 = vadd.f32 %v1005, %v1098
    %v1162 = vadd.f32 %v1006, %v1102
    %v1163 = vadd.f32 %v1007, %v1101
    %v1164 = vadd.f32 %v1008, %v1105
    %v1165 = vadd.f32 %v1009, %v1104
    %v1166 = vadd.f32 %v1010, %v1108
    %v1167 = vadd.f32 %v1011, %v1107
    %v1168 = vadd.f32 %v1012, %v1111
    %v1169 = vadd.f32 %v1013, %v1110
    %v1170 = vadd.f32 %v1014, %v1114
    %v1171 = vadd.f32 %v1015, %v1113
    %v1172 = vadd.f32 %v1016, %v1117
    %v1173 = vadd.f32 %v1017, %v1116
    %vm1174 = vcmask 15360
    %1175 = vst.msk [vmem:[%s3] sm:$0xff] %vm1174, %v1146
    %vm1176 = vcmask 13312
    %1177 = vst.msk [vmem:[%s3 + $0x8] sm:$0x3f] %vm1176, %v1147
    %1178 = vst.msk [vmem:[%s3 + $0x10] sm:$0xff] %vm1174, %v1148
    %1179 = vst.msk [vmem:[%s3 + $0x18] sm:$0x3f] %vm1176, %v1149
    %1180 = vst.msk [vmem:[%s3 + $0x20] sm:$0xff] %vm1174, %v1150
    %1181 = vst.msk [vmem:[%s3 + $0x28] sm:$0x3f] %vm1176, %v1151
    %1182 = vst.msk [vmem:[%s3 + $0x30] sm:$0xff] %vm1174, %v1152
    %1183 = vst.msk [vmem:[%s3 + $0x38] sm:$0x3f] %vm1176, %v1153
    %1184 = vst.msk [vmem:[%s3 + $0x40] sm:$0xff] %vm1174, %v1154
    %1185 = vst.msk [vmem:[%s3 + $0x48] sm:$0x3f] %vm1176, %v1155
    %1186 = vst.msk [vmem:[%s3 + $0x50] sm:$0xff] %vm1174, %v1156
    %1187 = vst.msk [vmem:[%s3 + $0x58] sm:$0x3f] %vm1176, %v1157
    %1188 = vst.msk [vmem:[%s3 + $0x60] sm:$0xff] %vm1174, %v1158
    %1189 = vst.msk [vmem:[%s3 + $0x68] sm:$0x3f] %vm1176, %v1159
    %1190 = vst.msk [vmem:[%s3 + $0x70] sm:$0xff] %vm1174, %v1160
    %1191 = vst.msk [vmem:[%s3 + $0x78] sm:$0x3f] %vm1176, %v1161
    %1192 = vst.msk [vmem:[%s3 + $0x80] sm:$0xff] %vm1174, %v1162
    %1193 = vst.msk [vmem:[%s3 + $0x88] sm:$0x3f] %vm1176, %v1163
    %1194 = vst.msk [vmem:[%s3 + $0x90] sm:$0xff] %vm1174, %v1164
    %1195 = vst.msk [vmem:[%s3 + $0x98] sm:$0x3f] %vm1176, %v1165
    %1196 = vst.msk [vmem:[%s3 + $0xa0] sm:$0xff] %vm1174, %v1166
    %1197 = vst.msk [vmem:[%s3 + $0xa8] sm:$0x3f] %vm1176, %v1167
    %1198 = vst.msk [vmem:[%s3 + $0xb0] sm:$0xff] %vm1174, %v1168
    %1199 = vst.msk [vmem:[%s3 + $0xb8] sm:$0x3f] %vm1176, %v1169
    %1200 = vst.msk [vmem:[%s3 + $0xc0] sm:$0xff] %vm1174, %v1170
    %1201 = vst.msk [vmem:[%s3 + $0xc8] sm:$0x3f] %vm1176, %v1171
    %1202 = vst.msk [vmem:[%s3 + $0xd0] sm:$0xff] %vm1174, %v1172
    %1203 = vst.msk [vmem:[%s3 + $0xd8] sm:$0x3f] %vm1176, %v1173
    // Predicated region
    $region18: #{conv2d_1x1ch_3x3.1} parent=1 // pred_check
      _
    $region19: #{conv2d_1x1ch_3x3.1} parent=1 // pred_check_branch
      %1205 = sbr.rel (0) target = $region21
    $region20: #{conv2d_1x1ch_3x3.1} parent=1 // pred_region
      _
    $region21: #{conv2d_1x1ch_3x3.1} parent=1 // pred_fallthru
      _
    // Predicated region
    $region22: #{conv2d_1x1ch_3x3.1} parent=1 // pred_check
      _
    $region23: #{conv2d_1x1ch_3x3.1} parent=1 // pred_check_branch
      %1207 = sbr.rel (0) target = $region25
    $region24: #{conv2d_1x1ch_3x3.1} parent=1 // pred_region
      _
    $region25: #{conv2d_1x1ch_3x3.1} parent=1 // pred_fallthru
      _
    %1208 = vsyncpa [#allocation4], 1

</llo_original>
